<compile_context>
chip_gen: v5e
topology: v5e:2x2
jax: 0.10.0
libtpu: 0.0.40
codegen_flags: <defaults>
</compile_context>

<pallas_src>
import jax
import jax.numpy as jnp
from jax.experimental import pallas as pl
from jax.experimental.pallas import tpu as pltpu

LANE = 128  # TPU lane width; fc21 weights are padded to this for the matmul.


def decoder_kernel(z_ref, w1_ref, b1_ref, w2_ref, b2_ref, out_ref):
    # fc1: (TB, Z) @ (Z, H) + (1, H), f32 accumulation on the MXU.
    h = jnp.dot(z_ref[...], w1_ref[...], preferred_element_type=jnp.float32)
    h = h + b1_ref[...]

    # Softplus with PyTorch semantics (beta=1, threshold=20):
    #   x              if x > 20
    #   log1p(exp(x))  otherwise
    # exp(h) for h > 20 only feeds the untaken branch (inf, never NaN).
    h = jnp.where(h > 20.0, h, jnp.log1p(jnp.exp(h)))

    # fc21 on lane-padded weights: (TB, H) @ (H, 128) + (1, 128).  The padded
    # columns (zeros) are discarded before the store, so they never hit HBM.
    logits = jnp.dot(h, w2_ref[...], preferred_element_type=jnp.float32)
    logits = logits + b2_ref[...]

    # Exact sigmoid via tanh: a single EUP push, values guaranteed in [0, 1].
    loc = 0.5 * (jnp.tanh(0.5 * logits) + 1.0)

    # Store only the real output columns (out_dim lanes); masked vst is cheap
    # because the store slot is nowhere near saturation here.
    out_ref[...] = loc[:, : out_ref.shape[1]].astype(out_ref.dtype)


def _round_up(x, m):
    return (x + m - 1) // m * m


def decoder_forward(z, w1, b1, w2, b2, *, tile_b=2048):
    """z: (B, z_dim); w1: (z_dim, H); b1: (1, H); w2: (H, 2); b2: (1, 2)."""
    batch, z_dim = z.shape
    hidden_dim, out_dim = w2.shape

    # Lane-pad fc21's weights/bias for a vreg-wide MXU matmul.  (Padding the
    # weights is free; only the stored result must stay unpadded.)
    w2p = jnp.zeros((hidden_dim, LANE), w2.dtype).at[:, :out_dim].set(w2)
    b2p = jnp.zeros((1, LANE), b2.dtype).at[:, :out_dim].set(b2)

    # Batch tile: multiple of 8 (sublane), capped so a large batch splits into
    # at least 2 grid steps (lets v7x's 2nd TensorCore share the "parallel"
    # axis).  Ragged last tiles are masked by Pallas, so no jnp.pad of z and
    # no output row slice are needed.
    tile_b = int(min(tile_b, max(8, _round_up(pl.cdiv(batch, 2), 8))))
    grid = (pl.cdiv(batch, tile_b),)

    return pl.pallas_call(
        decoder_kernel,
        out_shape=jax.ShapeDtypeStruct((batch, out_dim), z.dtype),
        grid=grid,
        in_specs=[
            pl.BlockSpec((tile_b, z_dim), lambda i: (i, 0)),       # z: streamed
            pl.BlockSpec((z_dim, hidden_dim), lambda i: (0, 0)),   # w1: resident
            pl.BlockSpec((1, hidden_dim), lambda i: (0, 0)),       # b1: resident
            pl.BlockSpec((hidden_dim, LANE), lambda i: (0, 0)),    # w2p: resident
            pl.BlockSpec((1, LANE), lambda i: (0, 0)),             # b2p: resident
        ],
        out_specs=pl.BlockSpec((tile_b, out_dim), lambda i: (i, 0)),
        compiler_params=pltpu.CompilerParams(
            dimension_semantics=("parallel",)),
    )(z, w1, b1, w2p, b2p)


def reference_forward(z, w1, b1, w2, b2):
    # Precision.HIGHEST so the f32 reference matmuls match the kernel's f32
    # MXU accumulation (XLA's default f32 dot on TPU may drop to bf16).
    hp = jax.lax.Precision.HIGHEST
    h = jnp.dot(z, w1, precision=hp) + b1
    h = jnp.where(h > 20.0, h, jnp.log1p(jnp.exp(jnp.minimum(h, 20.0))))
    return jax.nn.sigmoid(jnp.dot(h, w2, precision=hp) + b2)


if __name__ == "__main__":
    z_dim, hidden_dim, out_dim = 16, 32, 2

    key = jax.random.PRNGKey(0)
    k_z, k_w1, k_b1, k_w2, k_b2 = jax.random.split(key, 5)

    # Deterministic synthetic parameters (shapes match nn.Linear in __init__),
    # emulating PyTorch's default U(-1/sqrt(fan_in), 1/sqrt(fan_in)) scale.
    lim1 = 1.0 / jnp.sqrt(z_dim)
    w1 = jax.random.uniform(k_w1, (z_dim, hidden_dim), jnp.float32, -lim1, lim1)
    b1 = jax.random.uniform(k_b1, (1, hidden_dim), jnp.float32, -lim1, lim1)
    lim2 = 1.0 / jnp.sqrt(hidden_dim)
    w2 = jax.random.uniform(k_w2, (hidden_dim, out_dim), jnp.float32, -lim2, lim2)
    b2 = jax.random.uniform(k_b2, (1, out_dim), jnp.float32, -lim2, lim2)

    # Small-batch run (module-sized example).
    batch = 8
    z = jax.random.normal(k_z, (batch, z_dim), dtype=jnp.float32)
    loc = jax.block_until_ready(decoder_forward(z, w1, b1, w2, b2))
    ref = reference_forward(z, w1, b1, w2, b2)
    assert loc.shape == (batch, out_dim)
    assert jnp.allclose(loc, ref, atol=1e-4, rtol=1e-4), "mismatch (small batch)"

    # Larger, non-multiple batch exercises the pipelined grid + ragged tile.
    big_batch = 1000
    z_big = jax.random.normal(k_z, (big_batch, z_dim), dtype=jnp.float32)
    loc_big = jax.block_until_ready(decoder_forward(z_big, w1, b1, w2, b2))
    ref_big = reference_forward(z_big, w1, b1, w2, b2)
    assert loc_big.shape == (big_batch, out_dim)
    assert jnp.allclose(loc_big, ref_big, atol=1e-4, rtol=1e-4), "mismatch (big batch)"

    print("KERNEL_OK")
</pallas_src>

<mosaic_0001>
module attributes {stable_mosaic.version = 11 : i64} {
  func.func @decoder_kernel(%arg0: i32, %arg1: memref<8x16xf32, #tpu.memory_space<vmem>>, %arg2: memref<16x32xf32, #tpu.memory_space<vmem>>, %arg3: memref<1x32xf32, #tpu.memory_space<vmem>>, %arg4: memref<32x128xf32, #tpu.memory_space<vmem>>, %arg5: memref<1x128xf32, #tpu.memory_space<vmem>>, %arg6: memref<8x2xf32, #tpu.memory_space<vmem>>) attributes {dimension_semantics = [#tpu.dimension_semantics<parallel>], iteration_bounds = array<i64: 1>, scalar_prefetch = 0 : i64, scratch_operands = 0 : i64, tpu.core_type = #tpu.core_type<tc>, window_params = [{transform_indices = @transform_0, window_bounds = array<i64: 8, 16>}, {pipeline_mode = #tpu.pipeline_mode<synchronous>, transform_indices = @transform_1, window_bounds = array<i64: 16, 32>}, {pipeline_mode = #tpu.pipeline_mode<synchronous>, transform_indices = @transform_2, window_bounds = array<i64: 1, 32>}, {pipeline_mode = #tpu.pipeline_mode<synchronous>, transform_indices = @transform_3, window_bounds = array<i64: 32, 128>}, {pipeline_mode = #tpu.pipeline_mode<synchronous>, transform_indices = @transform_4, window_bounds = array<i64: 1, 128>}, {transform_indices = @transform_5, window_bounds = array<i64: 8, 2>}]} {
    %c0 = arith.constant 0 : index
    %c0_0 = arith.constant 0 : index
    %0 = vector.load %arg1[%c0, %c0_0] : memref<8x16xf32, #tpu.memory_space<vmem>>, vector<8x16xf32>
    %c0_1 = arith.constant 0 : index
    %c0_2 = arith.constant 0 : index
    %1 = vector.load %arg2[%c0_1, %c0_2] : memref<16x32xf32, #tpu.memory_space<vmem>>, vector<16x32xf32>
    %cst = arith.constant dense<0.000000e+00> : vector<8x32xf32>
    %2 = tpu.matmul %0, %1, %cst {dimension_numbers = #tpu.dot_dimension_numbers<[1], [0], [0], [1], [0, 0, 1, 1], [], []>} : vector<8x16xf32>, vector<16x32xf32>, vector<8x32xf32> -> vector<8x32xf32>
    %c0_3 = arith.constant 0 : index
    %c0_4 = arith.constant 0 : index
    %3 = vector.load %arg3[%c0_3, %c0_4] : memref<1x32xf32, #tpu.memory_space<vmem>>, vector<1x32xf32>
    %4 = vector.broadcast %3 : vector<1x32xf32> to vector<8x32xf32>
    %5 = arith.addf %2, %4 : vector<8x32xf32>
    %cst_5 = arith.constant 2.000000e+01 : f32
    %6 = vector.broadcast %cst_5 : f32 to vector<8x32xf32>
    %7 = arith.cmpf ogt, %5, %6 : vector<8x32xf32>
    %8 = math.exp %5 : vector<8x32xf32>
    %9 = math.log1p %8 : vector<8x32xf32>
    %10 = arith.select %7, %5, %9 : vector<8x32xi1>, vector<8x32xf32>
    %c0_6 = arith.constant 0 : index
    %c0_7 = arith.constant 0 : index
    %11 = vector.load %arg4[%c0_6, %c0_7] : memref<32x128xf32, #tpu.memory_space<vmem>>, vector<32x128xf32>
    %cst_8 = arith.constant dense<0.000000e+00> : vector<8x128xf32>
    %12 = tpu.matmul %10, %11, %cst_8 {dimension_numbers = #tpu.dot_dimension_numbers<[1], [0], [0], [1], [0, 0, 1, 1], [], []>} : vector<8x32xf32>, vector<32x128xf32>, vector<8x128xf32> -> vector<8x128xf32>
    %c0_9 = arith.constant 0 : index
    %c0_10 = arith.constant 0 : index
    %13 = vector.load %arg5[%c0_9, %c0_10] : memref<1x128xf32, #tpu.memory_space<vmem>>, vector<1x128xf32>
    %14 = vector.broadcast %13 : vector<1x128xf32> to vector<8x128xf32>
    %15 = arith.addf %12, %14 : vector<8x128xf32>
    %cst_11 = arith.constant 5.000000e-01 : f32
    %16 = vector.broadcast %cst_11 : f32 to vector<8x128xf32>
    %17 = arith.mulf %16, %15 : vector<8x128xf32>
    %18 = math.tanh %17 : vector<8x128xf32>
    %cst_12 = arith.constant 1.000000e+00 : f32
    %19 = vector.broadcast %cst_12 : f32 to vector<8x128xf32>
    %20 = arith.addf %18, %19 : vector<8x128xf32>
    %cst_13 = arith.constant 5.000000e-01 : f32
    %21 = vector.broadcast %cst_13 : f32 to vector<8x128xf32>
    %22 = arith.mulf %21, %20 : vector<8x128xf32>
    %23 = vector.extract_strided_slice %22 {offsets = [0, 0], sizes = [8, 2], strides = [1, 1]} : vector<8x128xf32> to vector<8x2xf32>
    %c0_14 = arith.constant 0 : index
    %c0_15 = arith.constant 0 : index
    %24 = vector.load %arg6[%c0_14, %c0_15] : memref<8x2xf32, #tpu.memory_space<vmem>>, vector<8x2xf32>
    tpu.vector_store %arg6[%c0_14, %c0_15], %23 {strides = array<i32>} : memref<8x2xf32, #tpu.memory_space<vmem>>, vector<8x2xf32>,
    return
  }
  func.func @transform_0(%arg0: i32) -> (i32, i32) {
    %c0_i32 = arith.constant 0 : i32
    %c0_i32_0 = arith.constant 0 : i32
    return %arg0, %c0_i32 : i32, i32
  }
  func.func @transform_1(%arg0: i32) -> (i32, i32) {
    %c0_i32 = arith.constant 0 : i32
    %c0_i32_0 = arith.constant 0 : i32
    %c0_i32_1 = arith.constant 0 : i32
    return %c0_i32, %c0_i32_0 : i32, i32
  }
  func.func @transform_2(%arg0: i32) -> (i32, i32) {
    %c0_i32 = arith.constant 0 : i32
    %c0_i32_0 = arith.constant 0 : i32
    %c0_i32_1 = arith.constant 0 : i32
    return %c0_i32, %c0_i32_0 : i32, i32
  }
  func.func @transform_3(%arg0: i32) -> (i32, i32) {
    %c0_i32 = arith.constant 0 : i32
    %c0_i32_0 = arith.constant 0 : i32
    %c0_i32_1 = arith.constant 0 : i32
    return %c0_i32, %c0_i32_0 : i32, i32
  }
  func.func @transform_4(%arg0: i32) -> (i32, i32) {
    %c0_i32 = arith.constant 0 : i32
    %c0_i32_0 = arith.constant 0 : i32
    %c0_i32_1 = arith.constant 0 : i32
    return %c0_i32, %c0_i32_0 : i32, i32
  }
  func.func @transform_5(%arg0: i32) -> (i32, i32) {
    %c0_i32 = arith.constant 0 : i32
    %c0_i32_0 = arith.constant 0 : i32
    return %arg0, %c0_i32 : i32, i32
  }
}

</mosaic_0001>

<llo_original>
// kernel: tpu_custom_call.1
$region0: #{tpu_custom_call.1}
  #allocation0 [shape = 'u32[]', space=smem, size = 0x4, offset = 0x4, fixed_abs, tag = 'smem constant byte address 0x4 - core index']
  #allocation1 [shape = 'u32[72,128]{1,0:T(1,128)}', space=vmem, size = 0x9000, scoped, tag = 'internal scratch']
  %s0 = inlined_call_operand.hbm [shape: f32[8,16], index: 0, kind: input, shape index: {}]
  %s1 = inlined_call_operand.hbm [shape: f32[16,32], index: 1, kind: input, shape index: {}]
  %s2 = inlined_call_operand.vmem [shape: f32[1,32], index: 2, kind: input, shape index: {}]
  %s3 = inlined_call_operand.hbm [shape: f32[32,128], index: 3, kind: input, shape index: {}]
  %s4 = inlined_call_operand.vmem [shape: f32[1,128], index: 4, kind: input, shape index: {}]
  %s5 = inlined_call_operand.vmem [shape: f32[8,2], index: 5, kind: output, shape index: {}]
  %s6 = sld [smem:[#allocation0]]
  $region42: #{tpu_custom_call.1} parent=0
    _
  %s8 = ssub.s32 1, %s6
  %s9 = scalar_select 0, %s8, %s6
  $region1: #{tpu_custom_call.1} parent=0
    #allocation2 [shape = 'u8[4096]{0}', space=vmem, size = 0x1000, scoped, tag = 'input window, operand 0, single buffered']
    #allocation3 [shape = 's32[1]{0}', space=sflag, size = 0x4, scoped, tag = 'scoped memory for tpu_custom_call.1']
    #allocation4 [shape = 'u8[8192]{0}', space=vmem, size = 0x2000, scoped, tag = 'input window, operand 1, single buffered']
    #allocation5 [shape = 's32[1]{0}', space=sflag, size = 0x4, scoped, tag = 'scoped memory for tpu_custom_call.1']
    #allocation6 [shape = 'u8[16384]{0}', space=vmem, size = 0x4000, scoped, tag = 'input window, operand 3, single buffered']
    %10 = vsyncpa [#allocation3], 0
    %11 = vsyncpa [#allocation5], 0
    // Predicated region
    $region2: #{tpu_custom_call.1} parent=1 // pred_check
      _
    $region3: #{tpu_custom_call.1} parent=1 // pred_check_branch
      %13 = sbr.rel (0) target = $region5
    $region4: #{tpu_custom_call.1} parent=1 // pred_region
      %15 = vsyncadd [#allocation3], 0
      %s17 = sshll.u32 %s0, 4
      %s18 = int_to_ptr.hbm [resolvable:$true] %s17
      %s19 = sshll.u32 [#allocation2], 4
      %s20 = int_to_ptr.vmem [resolvable:$true] %s19
      %22 = dma.hbm_to_vmem [thread:$0]  %s18, 128, %s20, [#allocation3]
    $region5: #{tpu_custom_call.1} parent=1 // pred_fallthru
      _
    // Predicated region
    $region6: #{tpu_custom_call.1} parent=1 // pred_check
      _
    $region7: #{tpu_custom_call.1} parent=1 // pred_check_branch
      %24 = sbr.rel (0) target = $region9
    $region8: #{tpu_custom_call.1} parent=1 // pred_region
      %26 = vsyncadd [#allocation5], 0
      %s27 = sshll.u32 %s1, 4
      %s28 = int_to_ptr.hbm [resolvable:$true] %s27
      %s29 = sshll.u32 [#allocation4], 4
      %s30 = int_to_ptr.vmem [resolvable:$true] %s29
      %35 = dma.hbm_to_vmem [thread:$0]  %s28, 256, %s30, [#allocation5], 128, 128, 8
    $region9: #{tpu_custom_call.1} parent=1 // pred_fallthru
      _
    // Predicated region
    $region10: #{tpu_custom_call.1} parent=1 // pred_check
      _
    $region11: #{tpu_custom_call.1} parent=1 // pred_check_branch
      %37 = sbr.rel (0) target = $region13
    $region12: #{tpu_custom_call.1} parent=1 // pred_region
      _
    $region13: #{tpu_custom_call.1} parent=1 // pred_fallthru
      _
    // Predicated region
    $region14: #{tpu_custom_call.1} parent=1 // pred_check
      _
    $region15: #{tpu_custom_call.1} parent=1 // pred_check_branch
      %39 = sbr.rel (0) target = $region17
    $region16: #{tpu_custom_call.1} parent=1 // pred_region
      %41 = vsyncadd [#allocation5], 0
      %s42 = sshll.u32 %s3, 4
      %s43 = int_to_ptr.hbm [resolvable:$true] %s42
      %s44 = sshll.u32 [#allocation6], 4
      %s45 = int_to_ptr.vmem [resolvable:$true] %s44
      %50 = dma.hbm_to_vmem [thread:$0]  %s43, 512, %s45, [#allocation5], 128, 128, 8
    $region17: #{tpu_custom_call.1} parent=1 // pred_fallthru
      _
    // Predicated region
    $region18: #{tpu_custom_call.1} parent=1 // pred_check
      _
    $region19: #{tpu_custom_call.1} parent=1 // pred_check_branch
      %52 = sbr.rel (0) target = $region21
    $region20: #{tpu_custom_call.1} parent=1 // pred_region
      _
    $region21: #{tpu_custom_call.1} parent=1 // pred_fallthru
      _
    // Predicated region
    $region22: #{tpu_custom_call.1} parent=1 // pred_check
      _
    $region23: #{tpu_custom_call.1} parent=1 // pred_check_branch
      %54 = sbr.rel (0) target = $region25
    $region24: #{tpu_custom_call.1} parent=1 // pred_region
      %56 = dma.done [#allocation3], 128
    $region25: #{tpu_custom_call.1} parent=1 // pred_fallthru
      _
    // Predicated region
    $region26: #{tpu_custom_call.1} parent=1 // pred_check
      _
    $region27: #{tpu_custom_call.1} parent=1 // pred_check_branch
      %58 = sbr.rel (0) target = $region29
    $region28: #{tpu_custom_call.1} parent=1 // pred_region
      %60 = dma.done [#allocation5], 256
    $region29: #{tpu_custom_call.1} parent=1 // pred_fallthru
      _
    // Predicated region
    $region30: #{tpu_custom_call.1} parent=1 // pred_check
      _
    $region31: #{tpu_custom_call.1} parent=1 // pred_check_branch
      %62 = sbr.rel (0) target = $region33
    $region32: #{tpu_custom_call.1} parent=1 // pred_region
      %64 = dma.done [#allocation5], 512
    $region33: #{tpu_custom_call.1} parent=1 // pred_fallthru
      _
    %v65 = vld [vmem:[#allocation2] sm:$0xff]
    %v66 = vld [vmem:[#allocation4] sm:$0xff]
    %v67 = vld [vmem:[#allocation4 + $0x8] sm:$0xff]
    %v68 = vld [vmem:[%s2] sm:$0x1]
    %v70 = vperm.slane %v68, 0
    %vm72 = vcmask 130048
    %v74 = vsel %vm72, %v65, 0
    %76 = vmatpush.msra.mxu0 0.0
    %77 = vmatpush.msra.mxu0 0.0
    %78 = vmatpush.msra.mxu0 0.0
    %79 = vmatpush.msra.mxu0 0.0
    %80 = vmatpush.msra.mxu0 0.0
    %81 = vmatpush.msra.mxu0 0.0
    %82 = vmatpush.msra.mxu0 0.0
    %83 = vmatpush.msra.mxu0 0.0
    %84 = vmatpush.msra.mxu0 0.0
    %85 = vmatpush.msra.mxu0 0.0
    %86 = vmatpush.msra.mxu0 0.0
    %87 = vmatpush.msra.mxu0 0.0
    %88 = vmatpush.msra.mxu0 0.0
    %89 = vmatpush.msra.mxu0 0.0
    %90 = vmatpush.msra.mxu0 %v67
    %91 = vmatpush.msra.mxu0 %v66
    %92 = vmatmul.f32.gmra.mxu0 %v74
    %v93 = vpop.f32.mrf.mxu0
    %v94 = vadd.f32 %v70, %v93
    %95 = vdwg.mxu0
    %vm96 = vcmp.gt.f32.partialorder %v94, 20.0
    %v97 = vmul.f32 %v94, 1.442695
    %v98 = vpow.pop %v97
    %v99 = vadd.f32 %v98, 1.0
    %v100 = vlog2.pop %v99
    %v101 = vmul.f32 %v100, 0.6931472
    %v102 = vmul.f32 -0.5, %v98
    %v103 = vadd.f32 %v102, 1.0
    %v104 = vmul.f32 %v103, %v98
    %v105 = vand.u32 2147483647, %v98
    %vm106 = vcmp.lt.f32.partialorder %v105, 0.0004427343
    %v107 = vsel %vm106, %v104, %v101
    %v108 = vsel %vm96, %v94, %v107
    %v109 = vld [vmem:[#allocation6] sm:$0xff]
    %v110 = vld [vmem:[#allocation6 + $0x8] sm:$0xff]
    %v111 = vld [vmem:[#allocation6 + $0x10] sm:$0xff]
    %v112 = vld [vmem:[#allocation6 + $0x18] sm:$0xff]
    %v113 = vld [vmem:[%s4] sm:$0x1]
    %v115 = vperm.slane %v113, 0
    %vm117 = vcmask 261120
    %v119 = vsel %vm117, %v108, 0
    %121 = vmatpush.msra.mxu0 0.0
    %122 = vmatpush.msra.mxu0 0.0
    %123 = vmatpush.msra.mxu0 0.0
    %124 = vmatpush.msra.mxu0 0.0
    %125 = vmatpush.msra.mxu0 0.0
    %126 = vmatpush.msra.mxu0 0.0
    %127 = vmatpush.msra.mxu0 0.0
    %128 = vmatpush.msra.mxu0 0.0
    %129 = vmatpush.msra.mxu0 0.0
    %130 = vmatpush.msra.mxu0 0.0
    %131 = vmatpush.msra.mxu0 0.0
    %132 = vmatpush.msra.mxu0 0.0
    %133 = vmatpush.msra.mxu0 %v112
    %134 = vmatpush.msra.mxu0 %v111
    %135 = vmatpush.msra.mxu0 %v110
    %136 = vmatpush.msra.mxu0 %v109
    %137 = vmatmul.f32.gmra.mxu0 %v119
    %v138 = vpop.f32.mrf.mxu0
    %v139 = vadd.f32 %v115, %v138
    %140 = vdwg.mxu0
    %v141 = vmul.f32 %v139, 0.5
    %v142 = vtanh.pop %v141
    %v143 = vadd.f32 %v142, 1.0
    %v144 = vmul.f32 %v143, 0.5
    %vm145 = vcmask 15360
    %146 = vst.msk [vmem:[%s5] sm:$0xff] %vm145, %v144
    // Predicated region
    $region34: #{tpu_custom_call.1} parent=1 // pred_check
      _
    $region35: #{tpu_custom_call.1} parent=1 // pred_check_branch
      %148 = sbr.rel (0) target = $region37
    $region36: #{tpu_custom_call.1} parent=1 // pred_region
      _
    $region37: #{tpu_custom_call.1} parent=1 // pred_fallthru
      _
    // Predicated region
    $region38: #{tpu_custom_call.1} parent=1 // pred_check
      _
    $region39: #{tpu_custom_call.1} parent=1 // pred_check_branch
      %150 = sbr.rel (0) target = $region41
    $region40: #{tpu_custom_call.1} parent=1 // pred_region
      _
    $region41: #{tpu_custom_call.1} parent=1 // pred_fallthru
      _
    %151 = vsyncpa [#allocation3], 1
    %152 = vsyncpa [#allocation5], 1

</llo_original>
